<compile_context>
chip_gen: v7x
topology: tpu7x:2x2x1
jax: 0.10.0
libtpu: 0.0.40
codegen_flags: <defaults>
</compile_context>

<pallas_src>
import jax
import jax.numpy as jnp
from jax.experimental import pallas as pl
from jax.experimental.pallas import tpu as pltpu

IN_F = 20
HID_F = 256
OUT_F = 10

MAX_TB = 2048           # batch tile cap; tb=2048 uses only a few MiB of VMEM
PALLAS_MIN_BATCH = 64   # below this, a plain XLA fusion is strictly faster


def _round_up(n, m):
    return ((n + m - 1) // m) * m


def mlp_kernel(x_ref, w1_ref, b1_ref, w2_ref, b2_ref, o_ref):
    # x_ref:  (tb, 20)   f32    w1_ref: (20, 256)  bf16   b1_ref: (1, 256) f32
    # w2_ref: (256, 10)  bf16   b2_ref: (1, 10)    f32    o_ref:  (tb, 10) f32
    x = x_ref[...].astype(jnp.bfloat16)                  # cast in-kernel (VPU)
    # Linear(20, 256): bf16 operands, f32 accumulation on the MXU.
    # K=20 is handled by Mosaic's internal VMEM padding (no HBM-side K pad).
    h = jnp.dot(x, w1_ref[...], preferred_element_type=jnp.float32)
    # Bias + ReLU in f32 on the VPU.
    h = jnp.maximum(h + b1_ref[...], 0.0)
    # Linear(256, 10): narrow-N matmul, f32 accumulation.
    y = jnp.dot(h.astype(jnp.bfloat16), w2_ref[...],
                preferred_element_type=jnp.float32)
    o_ref[...] = (y + b2_ref[...]).astype(o_ref.dtype)


def _mlp_reference(x, w1, b1, w2, b2):
    """Plain fused XLA expression (used for tiny batches and as a reference)."""
    h = jnp.maximum(x @ w1 + b1, 0.0)
    return (h @ w2 + b2).astype(x.dtype)


def my_sequential_forward(x, w1, b1, w2, b2):
    """Fused Linear(20,256) -> ReLU -> Linear(256,10).

    x: (B, 20); w1: (20, 256); b1: (1, 256); w2: (256, 10); b2: (1, 10).
    Returns (B, 10) in x.dtype.
    """
    batch = x.shape[0]

    # Tiny-batch path: launch-overhead dominated -> single XLA fusion.
    if batch < PALLAS_MIN_BATCH:
        return _mlp_reference(x, w1, b1, w2, b2)

    # Batch tile: multiple of 16 (bf16 sublane packing), capped by MAX_TB, and
    # additionally capped near batch/2 so the grid has >= 2 steps and the
    # ("parallel",) batch axis can be sharded across both v7x TensorCores.
    tb = min(MAX_TB, _round_up(batch, 16))
    if batch > 16:
        tb = min(tb, _round_up(-(-batch // 2), 16))
    padded_batch = _round_up(batch, tb)
    grid = (padded_batch // tb,)

    # Wrapper-side plumbing: only a row pad of x when batch % tb != 0; weights
    # cast once to bf16 (matmul operands), biases kept in f32.
    x_in = x.astype(jnp.float32)
    if padded_batch != batch:
        x_in = jnp.pad(x_in, ((0, padded_batch - batch), (0, 0)))
    w1_b = w1.astype(jnp.bfloat16)
    b1_f = b1.reshape(1, HID_F).astype(jnp.float32)
    w2_b = w2.astype(jnp.bfloat16)
    b2_f = b2.reshape(1, OUT_F).astype(jnp.float32)

    out = pl.pallas_call(
        mlp_kernel,
        out_shape=jax.ShapeDtypeStruct((padded_batch, OUT_F), jnp.float32),
        grid=grid,
        in_specs=[
            pl.BlockSpec((tb, IN_F), lambda i: (i, 0)),      # x tile (unpadded K)
            pl.BlockSpec((IN_F, HID_F), lambda i: (0, 0)),   # w1 (resident)
            pl.BlockSpec((1, HID_F), lambda i: (0, 0)),      # b1 (resident)
            pl.BlockSpec((HID_F, OUT_F), lambda i: (0, 0)),  # w2 (resident)
            pl.BlockSpec((1, OUT_F), lambda i: (0, 0)),      # b2 (resident)
        ],
        out_specs=pl.BlockSpec((tb, OUT_F), lambda i: (i, 0)),
        compiler_params=pltpu.CompilerParams(
            dimension_semantics=("parallel",)),  # v7x: shard batch over 2 TCs
    )(x_in, w1_b, b1_f, w2_b, b2_f)

    if padded_batch != batch:
        out = out[:batch]
    return out.astype(x.dtype)


def init_linear_params(key, fan_in, fan_out, dtype=jnp.float32):
    # Deterministic init mimicking torch.nn.Linear default:
    # U(-1/sqrt(fan_in), 1/sqrt(fan_in)) for both weight and bias.
    kw, kb = jax.random.split(key)
    bound = 1.0 / (fan_in ** 0.5)
    w = jax.random.uniform(kw, (fan_in, fan_out), dtype, -bound, bound)
    b = jax.random.uniform(kb, (1, fan_out), dtype, -bound, bound)
    return w, b


if __name__ == "__main__":
    key = jax.random.PRNGKey(0)
    kx, kb_, k1, k2 = jax.random.split(key, 4)

    w1, b1 = init_linear_params(k1, IN_F, HID_F)   # Linear(20, 256)
    w2, b2 = init_linear_params(k2, HID_F, OUT_F)  # Linear(256, 10)

    # --- The literal spec workload: X = torch.rand(2, 20) (tiny-batch path). ---
    x_small = jax.random.uniform(kx, (2, IN_F), jnp.float32)
    out_small = jax.block_until_ready(my_sequential_forward(x_small, w1, b1, w2, b2))
    assert out_small.shape == (2, OUT_F)
    ref_small = _mlp_reference(x_small, w1, b1, w2, b2)
    assert jnp.allclose(out_small, ref_small, atol=1e-5, rtol=1e-5)

    # --- A larger batch to exercise the Pallas kernel (grid of 2 tiles). ---
    x_big = jax.random.uniform(kb_, (256, IN_F), jnp.float32)
    out_big = jax.block_until_ready(my_sequential_forward(x_big, w1, b1, w2, b2))
    assert out_big.shape == (256, OUT_F)

    # Reference with the same bf16-operand / f32-accumulate math as the kernel.
    xb, w1b, w2b = (a.astype(jnp.bfloat16) for a in (x_big, w1, w2))
    h_ref = jnp.maximum(
        jnp.dot(xb, w1b, preferred_element_type=jnp.float32) + b1, 0.0)
    ref_big = jnp.dot(h_ref.astype(jnp.bfloat16), w2b,
                      preferred_element_type=jnp.float32) + b2
    assert jnp.allclose(out_big, ref_big, atol=2e-3, rtol=2e-3)

    # Sanity vs pure-f32 math (bf16-operand tolerance).
    ref_f32 = jnp.maximum(x_big @ w1 + b1, 0.0) @ w2 + b2
    assert jnp.allclose(out_big, ref_f32, atol=5e-2, rtol=5e-2)

    print("KERNEL_OK")
</pallas_src>

<mosaic_0001>
module attributes {stable_mosaic.version = 11 : i64} {
  func.func @mlp_kernel(%arg0: i32, %arg1: memref<128x20xf32, #tpu.memory_space<vmem>>, %arg2: memref<20x256xbf16, #tpu.memory_space<vmem>>, %arg3: memref<1x256xf32, #tpu.memory_space<vmem>>, %arg4: memref<256x10xbf16, #tpu.memory_space<vmem>>, %arg5: memref<1x10xf32, #tpu.memory_space<vmem>>, %arg6: memref<128x10xf32, #tpu.memory_space<vmem>>) attributes {dimension_semantics = [#tpu.dimension_semantics<parallel>], iteration_bounds = array<i64: 2>, scalar_prefetch = 0 : i64, scratch_operands = 0 : i64, tpu.core_type = #tpu.core_type<tc>, window_params = [{transform_indices = @transform_0, window_bounds = array<i64: 128, 20>}, {pipeline_mode = #tpu.pipeline_mode<synchronous>, transform_indices = @transform_1, window_bounds = array<i64: 20, 256>}, {pipeline_mode = #tpu.pipeline_mode<synchronous>, transform_indices = @transform_2, window_bounds = array<i64: 1, 256>}, {pipeline_mode = #tpu.pipeline_mode<synchronous>, transform_indices = @transform_3, window_bounds = array<i64: 256, 10>}, {pipeline_mode = #tpu.pipeline_mode<synchronous>, transform_indices = @transform_4, window_bounds = array<i64: 1, 10>}, {transform_indices = @transform_5, window_bounds = array<i64: 128, 10>}]} {
    %c0 = arith.constant 0 : index
    %c0_0 = arith.constant 0 : index
    %0 = vector.load %arg1[%c0, %c0_0] : memref<128x20xf32, #tpu.memory_space<vmem>>, vector<128x20xf32>
    %1 = arith.truncf %0 : vector<128x20xf32> to vector<128x20xbf16>
    %c0_1 = arith.constant 0 : index
    %c0_2 = arith.constant 0 : index
    %2 = vector.load %arg2[%c0_1, %c0_2] : memref<20x256xbf16, #tpu.memory_space<vmem>>, vector<20x256xbf16>
    %cst = arith.constant dense<0.000000e+00> : vector<128x256xf32>
    %3 = tpu.matmul %1, %2, %cst {dimension_numbers = #tpu.dot_dimension_numbers<[1], [0], [0], [1], [0, 0, 1, 1], [], []>} : vector<128x20xbf16>, vector<20x256xbf16>, vector<128x256xf32> -> vector<128x256xf32>
    %c0_3 = arith.constant 0 : index
    %c0_4 = arith.constant 0 : index
    %4 = vector.load %arg3[%c0_3, %c0_4] : memref<1x256xf32, #tpu.memory_space<vmem>>, vector<1x256xf32>
    %5 = vector.broadcast %4 : vector<1x256xf32> to vector<128x256xf32>
    %6 = arith.addf %3, %5 : vector<128x256xf32>
    %cst_5 = arith.constant 0.000000e+00 : f32
    %7 = vector.broadcast %cst_5 : f32 to vector<128x256xf32>
    %8 = arith.maximumf %6, %7 : vector<128x256xf32>
    %9 = arith.truncf %8 : vector<128x256xf32> to vector<128x256xbf16>
    %c0_6 = arith.constant 0 : index
    %c0_7 = arith.constant 0 : index
    %10 = vector.load %arg4[%c0_6, %c0_7] : memref<256x10xbf16, #tpu.memory_space<vmem>>, vector<256x10xbf16>
    %cst_8 = arith.constant dense<0.000000e+00> : vector<128x10xf32>
    %11 = tpu.matmul %9, %10, %cst_8 {dimension_numbers = #tpu.dot_dimension_numbers<[1], [0], [0], [1], [0, 0, 1, 1], [], []>} : vector<128x256xbf16>, vector<256x10xbf16>, vector<128x10xf32> -> vector<128x10xf32>
    %c0_9 = arith.constant 0 : index
    %c0_10 = arith.constant 0 : index
    %12 = vector.load %arg5[%c0_9, %c0_10] : memref<1x10xf32, #tpu.memory_space<vmem>>, vector<1x10xf32>
    %13 = vector.broadcast %12 : vector<1x10xf32> to vector<128x10xf32>
    %14 = arith.addf %11, %13 : vector<128x10xf32>
    %c0_11 = arith.constant 0 : index
    %c0_12 = arith.constant 0 : index
    %15 = vector.load %arg6[%c0_11, %c0_12] : memref<128x10xf32, #tpu.memory_space<vmem>>, vector<128x10xf32>
    tpu.vector_store %arg6[%c0_11, %c0_12], %14 {strides = array<i32>} : memref<128x10xf32, #tpu.memory_space<vmem>>, vector<128x10xf32>,
    return
  }
  func.func @transform_0(%arg0: i32) -> (i32, i32) {
    %c0_i32 = arith.constant 0 : i32
    %c0_i32_0 = arith.constant 0 : i32
    return %arg0, %c0_i32 : i32, i32
  }
  func.func @transform_1(%arg0: i32) -> (i32, i32) {
    %c0_i32 = arith.constant 0 : i32
    %c0_i32_0 = arith.constant 0 : i32
    %c0_i32_1 = arith.constant 0 : i32
    return %c0_i32, %c0_i32_0 : i32, i32
  }
  func.func @transform_2(%arg0: i32) -> (i32, i32) {
    %c0_i32 = arith.constant 0 : i32
    %c0_i32_0 = arith.constant 0 : i32
    %c0_i32_1 = arith.constant 0 : i32
    return %c0_i32, %c0_i32_0 : i32, i32
  }
  func.func @transform_3(%arg0: i32) -> (i32, i32) {
    %c0_i32 = arith.constant 0 : i32
    %c0_i32_0 = arith.constant 0 : i32
    %c0_i32_1 = arith.constant 0 : i32
    return %c0_i32, %c0_i32_0 : i32, i32
  }
  func.func @transform_4(%arg0: i32) -> (i32, i32) {
    %c0_i32 = arith.constant 0 : i32
    %c0_i32_0 = arith.constant 0 : i32
    %c0_i32_1 = arith.constant 0 : i32
    return %c0_i32, %c0_i32_0 : i32, i32
  }
  func.func @transform_5(%arg0: i32) -> (i32, i32) {
    %c0_i32 = arith.constant 0 : i32
    %c0_i32_0 = arith.constant 0 : i32
    return %arg0, %c0_i32 : i32, i32
  }
}

</mosaic_0001>

<llo_original>
// kernel: tpu_custom_call.1
$region0: #{tpu_custom_call.1}
  #allocation0 [shape = 'u32[]', space=smem, size = 0x4, offset = 0x4, fixed_abs, tag = 'smem constant byte address 0x4 - core index']
  #allocation1 [shape = 'u32[144,128]{1,0:T(1,128)}', space=vmem, size = 0x12000, scoped, tag = 'internal scratch']
  %s0 = inlined_call_operand.vmem [shape: f32[256,20], index: 0, kind: input, shape index: {}]
  %s1 = inlined_call_operand.vmem [shape: bf16[20,256], index: 1, kind: input, shape index: {}]
  %s2 = inlined_call_operand.vmem [shape: f32[1,256], index: 2, kind: input, shape index: {}]
  %s3 = inlined_call_operand.vmem [shape: bf16[256,10], index: 3, kind: input, shape index: {}]
  %s4 = inlined_call_operand.vmem [shape: f32[1,10], index: 4, kind: input, shape index: {}]
  %s5 = inlined_call_operand.vmem [shape: f32[256,10], index: 5, kind: output, shape index: {}]
  %s6 = sld [smem:[#allocation0]]
  $region53: #{tpu_custom_call.1} parent=0
    _
  %s8 = ssub.s32 1, %s6
  %s9 = scalar_select 0, %s8, %s6
  loop: start=0, step=1, limit=4
  $region2: #{tpu_custom_call.1} parent=0 // loop_pre_header
    _
  $region3: #{tpu_custom_call.1} parent=0 // loop_header
    %s11 = sphi 0, %s15
    %p12 = scmp.ge.s32.totalorder %s11, 4
    %s21 = sphi 0, %s23
    %s24 = sphi 0, %s21
    %s25 = sphi 0, %s24
    %s41 = sphi 0, %s25
    %s45 = sphi 0, %s45
    %s47 = sphi 0, %s45
    %s48 = sphi 0, %s47
    %s62 = sphi 0, %s48
    %s66 = sphi 0, %s66
    %s68 = sphi 0, %s66
    %s69 = sphi 0, %s68
    %s83 = sphi 0, %s69
    %s87 = sphi 0, %s87
    %s89 = sphi 0, %s87
    %s90 = sphi 0, %s89
    %s104 = sphi 0, %s90
    %s108 = sphi 0, %s108
    %s110 = sphi 0, %s108
    %s111 = sphi 0, %s110
    %s125 = sphi 0, %s111
    %s131 = sphi 0, %s133
    %s134 = sphi 0, %s131
    %s135 = sphi 0, %s134
    %s151 = sphi 0, %s135
  $region4: #{tpu_custom_call.1} parent=0 // loop_header_branch
    %14 = sbr.rel (%p12) target = $region8
  $region5: #{tpu_custom_call.1} parent=0 // loop_body
    %s16 = ssub.s32 %s11, 1
    %s17 = ssub.s32 %s11, 2
    %s18 = sadd.s32 %s11, 1
    %s19 = ssub.s32 %s11, %s18
    %p20 = scmp.eq.s32.totalorder %s19, 0
    %s22 = sadd.s32 %s21, 1
    %s23 = scalar_select %p20, %s21, %s22
    %p26 = pneg %p20
    %p27 = scmp.eq.s32.totalorder %s11, 1
    %p28 = por %p26, %p27
    %p29 = scmp.ne.s32.totalorder %s21, %s24
    %p30 = scmp.eq.s32.totalorder %s11, 0
    %p31 = por %p29, %p30
    %p32 = scmp.ne.s32.totalorder %s21, %s24
    %p33 = scmp.eq.s32.totalorder %s16, 1
    %p34 = por %p32, %p33
    %p35 = scmp.ne.s32.totalorder %s24, %s25
    %p36 = scmp.eq.s32.totalorder %s16, 0
    %p37 = por %p35, %p36
    %p38 = scmp.ne.s32.totalorder %s24, %s25
    %p39 = scmp.eq.s32.totalorder %s17, 1
    %p40 = por %p38, %p39
    %p42 = scmp.ne.s32.totalorder %s25, %s41
    %p43 = scmp.eq.s32.totalorder %s17, 0
    %p44 = por %p42, %p43
    %s46 = sadd.s32 %s45, 1
    %p49 = scmp.eq.s32.totalorder %s11, 1
    %p50 = scmp.ne.s32.totalorder %s45, %s47
    %p51 = scmp.eq.s32.totalorder %s11, 0
    %p52 = por %p50, %p51
    %p53 = scmp.ne.s32.totalorder %s45, %s47
    %p54 = scmp.eq.s32.totalorder %s16, 1
    %p55 = por %p53, %p54
    %p56 = scmp.ne.s32.totalorder %s47, %s48
    %p57 = scmp.eq.s32.totalorder %s16, 0
    %p58 = por %p56, %p57
    %p59 = scmp.ne.s32.totalorder %s47, %s48
    %p60 = scmp.eq.s32.totalorder %s17, 1
    %p61 = por %p59, %p60
    %p63 = scmp.ne.s32.totalorder %s48, %s62
    %p64 = scmp.eq.s32.totalorder %s17, 0
    %p65 = por %p63, %p64
    %s67 = sadd.s32 %s66, 1
    %p70 = scmp.eq.s32.totalorder %s11, 1
    %p71 = scmp.ne.s32.totalorder %s66, %s68
    %p72 = scmp.eq.s32.totalorder %s11, 0
    %p73 = por %p71, %p72
    %p74 = scmp.ne.s32.totalorder %s66, %s68
    %p75 = scmp.eq.s32.totalorder %s16, 1
    %p76 = por %p74, %p75
    %p77 = scmp.ne.s32.totalorder %s68, %s69
    %p78 = scmp.eq.s32.totalorder %s16, 0
    %p79 = por %p77, %p78
    %p80 = scmp.ne.s32.totalorder %s68, %s69
    %p81 = scmp.eq.s32.totalorder %s17, 1
    %p82 = por %p80, %p81
    %p84 = scmp.ne.s32.totalorder %s69, %s83
    %p85 = scmp.eq.s32.totalorder %s17, 0
    %p86 = por %p84, %p85
    %s88 = sadd.s32 %s87, 1
    %p91 = scmp.eq.s32.totalorder %s11, 1
    %p92 = scmp.ne.s32.totalorder %s87, %s89
    %p93 = scmp.eq.s32.totalorder %s11, 0
    %p94 = por %p92, %p93
    %p95 = scmp.ne.s32.totalorder %s87, %s89
    %p96 = scmp.eq.s32.totalorder %s16, 1
    %p97 = por %p95, %p96
    %p98 = scmp.ne.s32.totalorder %s89, %s90
    %p99 = scmp.eq.s32.totalorder %s16, 0
    %p100 = por %p98, %p99
    %p101 = scmp.ne.s32.totalorder %s89, %s90
    %p102 = scmp.eq.s32.totalorder %s17, 1
    %p103 = por %p101, %p102
    %p105 = scmp.ne.s32.totalorder %s90, %s104
    %p106 = scmp.eq.s32.totalorder %s17, 0
    %p107 = por %p105, %p106
    %s109 = sadd.s32 %s108, 1
    %p112 = scmp.eq.s32.totalorder %s11, 1
    %p113 = scmp.ne.s32.totalorder %s108, %s110
    %p114 = scmp.eq.s32.totalorder %s11, 0
    %p115 = por %p113, %p114
    %p116 = scmp.ne.s32.totalorder %s108, %s110
    %p117 = scmp.eq.s32.totalorder %s16, 1
    %p118 = por %p116, %p117
    %p119 = scmp.ne.s32.totalorder %s110, %s111
    %p120 = scmp.eq.s32.totalorder %s16, 0
    %p121 = por %p119, %p120
    %p122 = scmp.ne.s32.totalorder %s110, %s111
    %p123 = scmp.eq.s32.totalorder %s17, 1
    %p124 = por %p122, %p123
    %p126 = scmp.ne.s32.totalorder %s111, %s125
    %p127 = scmp.eq.s32.totalorder %s17, 0
    %p128 = por %p126, %p127
    %s129 = ssub.s32 %s11, %s18
    %p130 = scmp.eq.s32.totalorder %s129, 0
    %s132 = sadd.s32 %s131, 1
    %s133 = scalar_select %p130, %s131, %s132
    %p136 = pneg %p130
    %p137 = scmp.eq.s32.totalorder %s11, 1
    %p138 = por %p136, %p137
    %p139 = scmp.ne.s32.totalorder %s131, %s134
    %p140 = scmp.eq.s32.totalorder %s11, 0
    %p141 = por %p139, %p140
    %p142 = scmp.ne.s32.totalorder %s131, %s134
    %p143 = scmp.eq.s32.totalorder %s16, 1
    %p144 = por %p142, %p143
    %p145 = scmp.ne.s32.totalorder %s134, %s135
    %p146 = scmp.eq.s32.totalorder %s16, 0
    %p147 = por %p145, %p146
    %p148 = scmp.ne.s32.totalorder %s134, %s135
    %p149 = scmp.eq.s32.totalorder %s17, 1
    %p150 = por %p148, %p149
    %p152 = scmp.ne.s32.totalorder %s135, %s151
    %p153 = scmp.eq.s32.totalorder %s17, 0
    %p154 = por %p152, %p153
    %p155 = scmp.le.s32.totalorder 1, %s11
    %p156 = scmp.lt.s32.totalorder %s11, 3
    %p157 = pnand %p155, %p156
    %p158 = pneg %p157
    // Predicated region
    $region9: #{tpu_custom_call.1} parent=5 // pred_check
      _
    $region10: #{tpu_custom_call.1} parent=5 // pred_check_branch
      %160 = sbr.rel (%p157) target = $region12
    $region11: #{tpu_custom_call.1} parent=5 // pred_region
      %s161 = ssub.s32 %s11, 1
      // Predicated region
      $region13: #{tpu_custom_call.1} parent=11 // pred_check
        %p162 = pneg %p58
      $region14: #{tpu_custom_call.1} parent=11 // pred_check_branch
        %164 = sbr.rel (%p162) target = $region16
      $region15: #{tpu_custom_call.1} parent=11 // pred_region
        _
      $region16: #{tpu_custom_call.1} parent=11 // pred_fallthru
        _
      // Predicated region
      $region17: #{tpu_custom_call.1} parent=11 // pred_check
        %p165 = pneg %p79
      $region18: #{tpu_custom_call.1} parent=11 // pred_check_branch
        %167 = sbr.rel (%p165) target = $region20
      $region19: #{tpu_custom_call.1} parent=11 // pred_region
        _
      $region20: #{tpu_custom_call.1} parent=11 // pred_fallthru
        _
      // Predicated region
      $region21: #{tpu_custom_call.1} parent=11 // pred_check
        %p168 = pneg %p100
      $region22: #{tpu_custom_call.1} parent=11 // pred_check_branch
        %170 = sbr.rel (%p168) target = $region24
      $region23: #{tpu_custom_call.1} parent=11 // pred_region
        _
      $region24: #{tpu_custom_call.1} parent=11 // pred_fallthru
        _
      // Predicated region
      $region25: #{tpu_custom_call.1} parent=11 // pred_check
        %p171 = pneg %p121
      $region26: #{tpu_custom_call.1} parent=11 // pred_check_branch
        %173 = sbr.rel (%p171) target = $region28
      $region27: #{tpu_custom_call.1} parent=11 // pred_region
        _
      $region28: #{tpu_custom_call.1} parent=11 // pred_fallthru
        _
    $region12: #{tpu_custom_call.1} parent=5 // pred_fallthru
      _
    %p174 = scmp.lt.s32.totalorder %s11, 2
    // Predicated region
    $region29: #{tpu_custom_call.1} parent=5 // pred_check
      %p175 = pneg %p174
    $region30: #{tpu_custom_call.1} parent=5 // pred_check_branch
      %177 = sbr.rel (%p175) target = $region32
    $region31: #{tpu_custom_call.1} parent=5 // pred_region
      // Predicated region
      $region33: #{tpu_custom_call.1} parent=31 // pred_check
        %p178 = pneg %p31
      $region34: #{tpu_custom_call.1} parent=31 // pred_check_branch
        %180 = sbr.rel (%p178) target = $region36
      $region35: #{tpu_custom_call.1} parent=31 // pred_region
        %s181 = smul.u32 16, %s11
        %p182 = scmp.lt.s32.totalorder %s181, 31
        %s183 = scalar_select %p182, %s181, 31
        %s184 = smul.addr %s183, 8
        %s185 = scalar_lea.vmem %s0, %s184
        %s186 = smul.u32 16, %s11
      $region36: #{tpu_custom_call.1} parent=31 // pred_fallthru
        _
    $region32: #{tpu_custom_call.1} parent=5 // pred_fallthru
      _
    %p187 = scmp.le.s32.totalorder 1, %s11
    %p188 = scmp.lt.s32.totalorder %s11, 3
    %p189 = pnand %p187, %p188
    %p190 = pneg %p189
    // Predicated region
    $region37: #{tpu_custom_call.1} parent=5 // pred_check
      _
    $region38: #{tpu_custom_call.1} parent=5 // pred_check_branch
      %192 = sbr.rel (%p189) target = $region40
    $region39: #{tpu_custom_call.1} parent=5 // pred_region
      %s193 = ssub.s32 %s11, 1
      %s194 = smul.u32 16, %s16
      %p195 = scmp.lt.s32.totalorder %s194, 31
      %s196 = scalar_select %p195, %s194, 31
      %s197 = smul.addr %s196, 8
      %s198 = scalar_lea.vmem %s0, %s197
      %p199 = pneg %p37
      %p200 = pneg %p34
      %p201 = pneg %p58
      %p202 = pneg %p55
      %p203 = pneg %p79
      %p204 = pneg %p76
      %p205 = pneg %p100
      %p206 = pneg %p97
      %p207 = pneg %p121
      %p208 = pneg %p118
      %p209 = pneg %p147
      %p210 = pneg %p144
      %s211 = smul.u32 16, %s16
      %p212 = scmp.lt.s32.totalorder %s211, 31
      %s213 = scalar_select %p212, %s211, 31
      %s214 = smul.addr %s213, 8
      %s215 = scalar_lea.vmem %s5, %s214
      %s216 = smul.u32 16, %s16
      %p217 = scmp.lt.s32.totalorder %s216, 31
      %s218 = scalar_select %p217, %s216, 31
      %s219 = smul.addr %s218, 8
      %s220 = scalar_lea.vmem %s0, %s219
      %s221 = smul.u32 16, %s16
      %s222 = smul.u32 16, %s16
      %p223 = scmp.lt.s32.totalorder %s222, 31
      %s224 = scalar_select %p223, %s222, 31
      %s225 = smul.addr %s224, 8
      %s226 = scalar_lea.vmem %s5, %s225
      %s227 = smul.u32 16, %s16
      %v229 = vld [vmem:[%s220] sm:$0xff]
      %v230 = vld [vmem:[%s220 + $0x8] sm:$0xff]
      %v231 = vld [vmem:[%s220 + $0x10] sm:$0xff]
      %v232 = vld [vmem:[%s220 + $0x18] sm:$0xff]
      %v233 = vld [vmem:[%s220 + $0x20] sm:$0xff]
      %v234 = vld [vmem:[%s220 + $0x28] sm:$0xff]
      %v235 = vld [vmem:[%s220 + $0x30] sm:$0xff]
      %v236 = vld [vmem:[%s220 + $0x38] sm:$0xff]
      %v237 = vld [vmem:[%s220 + $0x40] sm:$0xff]
      %v238 = vld [vmem:[%s220 + $0x48] sm:$0xff]
      %v239 = vld [vmem:[%s220 + $0x50] sm:$0xff]
      %v240 = vld [vmem:[%s220 + $0x58] sm:$0xff]
      %v241 = vld [vmem:[%s220 + $0x60] sm:$0xff]
      %v242 = vld [vmem:[%s220 + $0x68] sm:$0xff]
      %v243 = vld [vmem:[%s220 + $0x70] sm:$0xff]
      %v244 = vld [vmem:[%s220 + $0x78] sm:$0xff]
      %v245 = vpack.c.bf16 %v230, %v229
      %v246 = vpack.c.bf16 %v232, %v231
      %v247 = vpack.c.bf16 %v234, %v233
      %v248 = vpack.c.bf16 %v236, %v235
      %v249 = vpack.c.bf16 %v238, %v237
      %v250 = vpack.c.bf16 %v240, %v239
      %v251 = vpack.c.bf16 %v242, %v241
      %v252 = vpack.c.bf16 %v244, %v243
      %v253 = vld [vmem:[%s1] sm:$0xff]
      %v254 = vld [vmem:[%s1 + $0x8] sm:$0xff]
      %v255 = vld [vmem:[%s1 + $0x10] sm:$0x33]
      %v256 = vld [vmem:[%s2] sm:$0x3]
      %v258 = vlaneseq
      %v259 = vshrl.u32 %v258, 7
      %v260 = vsub.s32 0, %v259
      %v261 = vrot.slane %v256, %v260
      %v262 = vlaneseq
      %v263 = vshrl.u32 %v262, 7
      %v264 = vsub.s32 1, %v263
      %v265 = vrot.slane %v256, %v264
      %v271 = vunpack.c.l.b16 %v253
      %v272 = vunpack.c.h.b16 %v253
      %v273 = vunpack.c.l.b16 %v254
      %v274 = vunpack.c.h.b16 %v254
      %v275 = vunpack.c.l.b16 %v255
      %v276 = vunpack.c.h.b16 %v255
      %v277 = vpack.c.b16 %v273, %v271
      %v278 = vpack.c.b16 %v274, %v272
      %v279 = vpack.c.b16 %v275, %v275
      %v280 = vpack.c.b16 %v276, %v276
      %vm283 = vcmask 162816
      %v285 = vsel %vm283, %v245, 0
      %v288 = vsel %vm283, %v246, 0
      %v291 = vsel %vm283, %v247, 0
      %v294 = vsel %vm283, %v248, 0
      %v297 = vsel %vm283, %v249, 0
      %v300 = vsel %vm283, %v250, 0
      %v303 = vsel %vm283, %v251, 0
      %v306 = vsel %vm283, %v252, 0
      %vm308 = vcmask 1041408
      %v310 = vsel %vm308, %v279, 0
      %v313 = vsel %vm308, %v280, 0
      %315 = vmatprep.subr.bf16.mxu0 %v278
      %316 = vmatpush1.bf16.msra.mxu0 %v277
      %317 = vmatprep.subr.bf16.mxu0 %v313
      %318 = vmatpush1.bf16.msra.mxu0 %v310
      %319 = vmatprep.subr.bf16.mxu0 0
      %320 = vmatpush1.bf16.msra.mxu0 0
      %321 = vmatprep.subr.bf16.mxu0 0
      %322 = vmatpush1.bf16.msra.mxu0 0
      %323 = vmatprep.subr.bf16.mxu0 0
      %324 = vmatpush1.bf16.msra.mxu0 0
      %325 = vmatprep.subr.bf16.mxu0 0
      %326 = vmatpush1.bf16.msra.mxu0 0
      %327 = vmatprep.subr.bf16.mxu0 0
      %328 = vmatpush1.bf16.msra.mxu0 0
      %329 = vmatprep.subr.bf16.mxu0 0
      %330 = vmatpush1.bf16.msra.mxu0 0
      %331 = vmatprep.subr.bf16.mxu0 0
      %332 = vmatpush1.bf16.msra.mxu0 0
      %333 = vmatprep.subr.bf16.mxu0 0
      %334 = vmatpush1.bf16.msra.mxu0 0
      %335 = vmatprep.subr.bf16.mxu0 0
      %336 = vmatpush1.bf16.msra.mxu0 0
      %337 = vmatprep.subr.bf16.mxu0 0
      %338 = vmatpush1.bf16.msra.mxu0 0
      %339 = vmatprep.subr.bf16.mxu0 0
      %340 = vmatpush1.bf16.msra.mxu0 0
      %341 = vmatprep.subr.bf16.mxu0 0
      %342 = vmatpush1.bf16.msra.mxu0 0
      %343 = vmatprep.subr.bf16.mxu0 0
      %344 = vmatpush1.bf16.msra.mxu0 0
      %345 = vmatprep.subr.bf16.mxu0 0
      %346 = vmatpush1.bf16.msra.mxu0 0
      %347 = vmatprep.mubr.bf16.mxu0 0
      %348 = vmatmul.mubr.bf16.gmra.mrb[0].mxu0 %v285
      %v349 = vpop.f32.mrb[0].mxu0
      %v350 = vadd.f32 %v261, %v349
      %v351 = vpop.f32.mrb[0].mxu0
      %v352 = vadd.f32 %v265, %v351
      %v353 = vpop.f32.mrb[0].mxu0
      %v354 = vadd.f32 %v261, %v353
      %v355 = vpop.f32.mrb[0].mxu0
      %v356 = vadd.f32 %v265, %v355
      %357 = vmatprep.mubr.bf16.mxu0 0
      %358 = vmatmul.mubr.bf16.gmra.mrb[0].mxu0 %v288
      %v359 = vpop.f32.mrb[0].mxu0
      %v360 = vadd.f32 %v261, %v359
      %v361 = vpop.f32.mrb[0].mxu0
      %v362 = vadd.f32 %v265, %v361
      %v363 = vpop.f32.mrb[0].mxu0
      %v364 = vadd.f32 %v261, %v363
      %v365 = vpop.f32.mrb[0].mxu0
      %v366 = vadd.f32 %v265, %v365
      %367 = vmatprep.mubr.bf16.mxu0 0
      %368 = vmatmul.mubr.bf16.gmra.mrb[0].mxu0 %v291
      %v369 = vpop.f32.mrb[0].mxu0
      %v370 = vadd.f32 %v261, %v369
      %v371 = vpop.f32.mrb[0].mxu0
      %v372 = vadd.f32 %v265, %v371
      %v373 = vpop.f32.mrb[0].mxu0
      %v374 = vadd.f32 %v261, %v373
      %v375 = vpop.f32.mrb[0].mxu0
      %v376 = vadd.f32 %v265, %v375
      %377 = vmatprep.mubr.bf16.mxu0 0
      %378 = vmatmul.mubr.bf16.gmra.mrb[0].mxu0 %v294
      %v379 = vpop.f32.mrb[0].mxu0
      %v380 = vadd.f32 %v261, %v379
      %v381 = vpop.f32.mrb[0].mxu0
      %v382 = vadd.f32 %v265, %v381
      %v383 = vpop.f32.mrb[0].mxu0
      %v384 = vadd.f32 %v261, %v383
      %v385 = vpop.f32.mrb[0].mxu0
      %v386 = vadd.f32 %v265, %v385
      %387 = vmatprep.mubr.bf16.mxu0 0
      %388 = vmatmul.mubr.bf16.gmra.mrb[0].mxu0 %v297
      %v389 = vpop.f32.mrb[0].mxu0
      %v390 = vadd.f32 %v261, %v389
      %v391 = vpop.f32.mrb[0].mxu0
      %v392 = vadd.f32 %v265, %v391
      %v393 = vpop.f32.mrb[0].mxu0
      %v394 = vadd.f32 %v261, %v393
      %v395 = vpop.f32.mrb[0].mxu0
      %v396 = vadd.f32 %v265, %v395
      %397 = vmatprep.mubr.bf16.mxu0 0
      %398 = vmatmul.mubr.bf16.gmra.mrb[0].mxu0 %v300
      %v399 = vpop.f32.mrb[0].mxu0
      %v400 = vadd.f32 %v261, %v399
      %v401 = vpop.f32.mrb[0].mxu0
      %v402 = vadd.f32 %v265, %v401
      %v403 = vpop.f32.mrb[0].mxu0
      %v404 = vadd.f32 %v261, %v403
      %v405 = vpop.f32.mrb[0].mxu0
      %v406 = vadd.f32 %v265, %v405
      %407 = vmatprep.mubr.bf16.mxu0 0
      %408 = vmatmul.mubr.bf16.gmra.mrb[0].mxu0 %v303
      %v409 = vpop.f32.mrb[0].mxu0
      %v410 = vadd.f32 %v261, %v409
      %v411 = vpop.f32.mrb[0].mxu0
      %v412 = vadd.f32 %v265, %v411
      %v413 = vpop.f32.mrb[0].mxu0
      %v414 = vadd.f32 %v261, %v413
      %v415 = vpop.f32.mrb[0].mxu0
      %v416 = vadd.f32 %v265, %v415
      %417 = vmatprep.mubr.bf16.mxu0 0
      %418 = vmatmul.mubr.bf16.gmra.mrb[0].mxu0 %v306
      %v419 = vpop.f32.mrb[0].mxu0
      %v420 = vadd.f32 %v261, %v419
      %v421 = vpop.f32.mrb[0].mxu0
      %v422 = vadd.f32 %v265, %v421
      %v423 = vpop.f32.mrb[0].mxu0
      %v424 = vadd.f32 %v261, %v423
      %v425 = vpop.f32.mrb[0].mxu0
      %v426 = vadd.f32 %v265, %v425
      %427 = vdwg.mxu0
      %v428 = vmax.f32 %v350, 0.0
      %v429 = vmax.f32 %v352, 0.0
      %v430 = vmax.f32 %v354, 0.0
      %v431 = vmax.f32 %v356, 0.0
      %v432 = vmax.f32 %v360, 0.0
      %v433 = vmax.f32 %v362, 0.0
      %v434 = vmax.f32 %v364, 0.0
      %v435 = vmax.f32 %v366, 0.0
      %v436 = vmax.f32 %v370, 0.0
      %v437 = vmax.f32 %v372, 0.0
      %v438 = vmax.f32 %v374, 0.0
      %v439 = vmax.f32 %v376, 0.0
      %v440 = vmax.f32 %v380, 0.0
      %v441 = vmax.f32 %v382, 0.0
      %v442 = vmax.f32 %v384, 0.0
      %v443 = vmax.f32 %v386, 0.0
      %v444 = vmax.f32 %v390, 0.0
      %v445 = vmax.f32 %v392, 0.0
      %v446 = vmax.f32 %v394, 0.0
      %v447 = vmax.f32 %v396, 0.0
      %v448 = vmax.f32 %v400, 0.0
      %v449 = vmax.f32 %v402, 0.0
      %v450 = vmax.f32 %v404, 0.0
      %v451 = vmax.f32 %v406, 0.0
      %v452 = vmax.f32 %v410, 0.0
      %v453 = vmax.f32 %v412, 0.0
      %v454 = vmax.f32 %v414, 0.0
      %v455 = vmax.f32 %v416, 0.0
      %v456 = vmax.f32 %v420, 0.0
      %v457 = vmax.f32 %v422, 0.0
      %v458 = vmax.f32 %v424, 0.0
      %v459 = vmax.f32 %v426, 0.0
      %v460 = vpack.c.bf16 %v430, %v428
      %v461 = vpack.c.bf16 %v431, %v429
      %v462 = vpack.c.bf16 %v434, %v432
      %v463 = vpack.c.bf16 %v435, %v433
      %v464 = vpack.c.bf16 %v438, %v436
      %v465 = vpack.c.bf16 %v439, %v437
      %v466 = vpack.c.bf16 %v442, %v440
      %v467 = vpack.c.bf16 %v443, %v441
      %v468 = vpack.c.bf16 %v446, %v444
      %v469 = vpack.c.bf16 %v447, %v445
      %v470 = vpack.c.bf16 %v450, %v448
      %v471 = vpack.c.bf16 %v451, %v449
      %v472 = vpack.c.bf16 %v454, %v452
      %v473 = vpack.c.bf16 %v455, %v453
      %v474 = vpack.c.bf16 %v458, %v456
      %v475 = vpack.c.bf16 %v459, %v457
      %v476 = vld [vmem:[%s3] sm:$0xf]
      %v477 = vld [vmem:[%s3 + $0x4] sm:$0xf]
      %v478 = vld [vmem:[%s3 + $0x8] sm:$0xf]
      %v479 = vld [vmem:[%s3 + $0xc] sm:$0xf]
      %v480 = vld [vmem:[%s3 + $0x10] sm:$0xf]
      %v481 = vld [vmem:[%s3 + $0x14] sm:$0xf]
      %v482 = vld [vmem:[%s3 + $0x18] sm:$0xf]
      %v483 = vld [vmem:[%s3 + $0x1c] sm:$0xf]
      %v484 = vld [vmem:[%s3 + $0x20] sm:$0xf]
      %v485 = vld [vmem:[%s3 + $0x24] sm:$0xf]
      %v486 = vld [vmem:[%s3 + $0x28] sm:$0xf]
      %v487 = vld [vmem:[%s3 + $0x2c] sm:$0xf]
      %v488 = vld [vmem:[%s3 + $0x30] sm:$0xf]
      %v489 = vld [vmem:[%s3 + $0x34] sm:$0xf]
      %v490 = vld [vmem:[%s3 + $0x38] sm:$0xf]
      %v491 = vld [vmem:[%s3 + $0x3c] sm:$0xf]
      %v492 = vld [vmem:[%s3 + $0x40] sm:$0xf]
      %v493 = vld [vmem:[%s3 + $0x44] sm:$0xf]
      %v494 = vld [vmem:[%s3 + $0x48] sm:$0xf]
      %v495 = vld [vmem:[%s3 + $0x4c] sm:$0xf]
      %v496 = vld [vmem:[%s3 + $0x50] sm:$0xf]
      %v497 = vld [vmem:[%s3 + $0x54] sm:$0xf]
      %v498 = vld [vmem:[%s3 + $0x58] sm:$0xf]
      %v499 = vld [vmem:[%s3 + $0x5c] sm:$0xf]
      %v500 = vld [vmem:[%s3 + $0x60] sm:$0xf]
      %v501 = vld [vmem:[%s3 + $0x64] sm:$0xf]
      %v502 = vld [vmem:[%s3 + $0x68] sm:$0xf]
      %v503 = vld [vmem:[%s3 + $0x6c] sm:$0xf]
      %v504 = vld [vmem:[%s3 + $0x70] sm:$0xf]
      %v505 = vld [vmem:[%s3 + $0x74] sm:$0xf]
      %v506 = vld [vmem:[%s3 + $0x78] sm:$0xf]
      %v507 = vld [vmem:[%s3 + $0x7c] sm:$0xf]
      %v508 = vld [vmem:[%s4] sm:$0x1]
      %v510 = vlaneseq
      %v511 = vshrl.u32 %v510, 7
      %v512 = vsub.s32 0, %v511
      %v513 = vrot.slane %v508, %v512
      %v547 = vunpack.c.l.b16 %v476
      %v548 = vunpack.c.l.b16 %v477
      %v549 = vunpack.c.l.b16 %v478
      %v550 = vunpack.c.l.b16 %v479
      %v551 = vunpack.c.l.b16 %v480
      %v552 = vunpack.c.l.b16 %v481
      %v553 = vunpack.c.l.b16 %v482
      %v554 = vunpack.c.l.b16 %v483
      %v555 = vunpack.c.l.b16 %v484
      %v556 = vunpack.c.l.b16 %v485
      %v557 = vunpack.c.l.b16 %v486
      %v558 = vunpack.c.l.b16 %v487
      %v559 = vunpack.c.l.b16 %v488
      %v560 = vunpack.c.l.b16 %v489
      %v561 = vunpack.c.l.b16 %v490
      %v562 = vunpack.c.l.b16 %v491
      %v563 = vunpack.c.l.b16 %v492
      %v564 = vunpack.c.l.b16 %v493
      %v565 = vunpack.c.l.b16 %v494
      %v566 = vunpack.c.l.b16 %v495
      %v567 = vunpack.c.l.b16 %v496
      %v568 = vunpack.c.l.b16 %v497
      %v569 = vunpack.c.l.b16 %v498
      %v570 = vunpack.c.l.b16 %v499
      %v571 = vunpack.c.l.b16 %v500
      %v572 = vunpack.c.l.b16 %v501
      %v573 = vunpack.c.l.b16 %v502
      %v574 = vunpack.c.l.b16 %v503
      %v575 = vunpack.c.l.b16 %v504
      %v576 = vunpack.c.l.b16 %v505
      %v577 = vunpack.c.l.b16 %v506
      %v578 = vunpack.c.l.b16 %v507
      %v579 = vpack.c.b16 %v548, %v547
      %v580 = vpack.c.b16 %v550, %v549
      %v581 = vpack.c.b16 %v552, %v551
      %v582 = vpack.c.b16 %v554, %v553
      %v583 = vpack.c.b16 %v556, %v555
      %v584 = vpack.c.b16 %v558, %v557
      %v585 = vpack.c.b16 %v560, %v559
      %v586 = vpack.c.b16 %v562, %v561
      %v587 = vpack.c.b16 %v564, %v563
      %v588 = vpack.c.b16 %v566, %v565
      %v589 = vpack.c.b16 %v568, %v567
      %v590 = vpack.c.b16 %v570, %v569
      %v591 = vpack.c.b16 %v572, %v571
      %v592 = vpack.c.b16 %v574, %v573
      %v593 = vpack.c.b16 %v576, %v575
      %v594 = vpack.c.b16 %v578, %v577
      %611 = vmatprep.subr.bf16.mxu0 0
      %612 = vmatpush1.bf16.msra.mxu0 %v579
      %613 = vmatprep.subr.bf16.mxu0 0
      %614 = vmatpush1.bf16.msra.mxu0 %v580
      %615 = vmatprep.subr.bf16.mxu0 0
      %616 = vmatpush1.bf16.msra.mxu0 %v581
      %617 = vmatprep.subr.bf16.mxu0 0
      %618 = vmatpush1.bf16.msra.mxu0 %v582
      %619 = vmatprep.subr.bf16.mxu0 0
      %620 = vmatpush1.bf16.msra.mxu0 %v583
      %621 = vmatprep.subr.bf16.mxu0 0
      %622 = vmatpush1.bf16.msra.mxu0 %v584
      %623 = vmatprep.subr.bf16.mxu0 0
      %624 = vmatpush1.bf16.msra.mxu0 %v585
      %625 = vmatprep.subr.bf16.mxu0 0
      %626 = vmatpush1.bf16.msra.mxu0 %v586
      %627 = vmatprep.subr.bf16.mxu0 0
      %628 = vmatpush1.bf16.msra.mxu0 %v587
      %629 = vmatprep.subr.bf16.mxu0 0
      %630 = vmatpush1.bf16.msra.mxu0 %v588
      %631 = vmatprep.subr.bf16.mxu0 0
      %632 = vmatpush1.bf16.msra.mxu0 %v589
      %633 = vmatprep.subr.bf16.mxu0 0
      %634 = vmatpush1.bf16.msra.mxu0 %v590
      %635 = vmatprep.subr.bf16.mxu0 0
      %636 = vmatpush1.bf16.msra.mxu0 %v591
      %637 = vmatprep.subr.bf16.mxu0 0
      %638 = vmatpush1.bf16.msra.mxu0 %v592
      %639 = vmatprep.subr.bf16.mxu0 0
      %640 = vmatpush1.bf16.msra.mxu0 %v593
      %641 = vmatprep.subr.bf16.mxu0 0
      %642 = vmatpush1.bf16.msra.mxu0 %v594
      %643 = vmatprep.mubr.bf16.mxu0 %v461
      %644 = vmatmul.mubr.bf16.gmra.mrb[0].mxu0 %v460
      %v645 = vpop.f32.mrb[0].mxu0
      %v646 = vadd.f32 %v513, %v645
      %v647 = vpop.f32.mrb[0].mxu0
      %v648 = vpop.f32.mrb[0].mxu0
      %v649 = vadd.f32 %v513, %v648
      %v650 = vpop.f32.mrb[0].mxu0
      %651 = vmatprep.mubr.bf16.mxu0 %v463
      %652 = vmatmul.mubr.bf16.gmra.mrb[0].mxu0 %v462
      %v653 = vpop.f32.mrb[0].mxu0
      %v654 = vadd.f32 %v513, %v653
      %v655 = vpop.f32.mrb[0].mxu0
      %v656 = vpop.f32.mrb[0].mxu0
      %v657 = vadd.f32 %v513, %v656
      %v658 = vpop.f32.mrb[0].mxu0
      %659 = vmatprep.mubr.bf16.mxu0 %v465
      %660 = vmatmul.mubr.bf16.gmra.mrb[0].mxu0 %v464
      %v661 = vpop.f32.mrb[0].mxu0
      %v662 = vadd.f32 %v513, %v661
      %v663 = vpop.f32.mrb[0].mxu0
      %v664 = vpop.f32.mrb[0].mxu0
      %v665 = vadd.f32 %v513, %v664
      %v666 = vpop.f32.mrb[0].mxu0
      %667 = vmatprep.mubr.bf16.mxu0 %v467
      %668 = vmatmul.mubr.bf16.gmra.mrb[0].mxu0 %v466
      %v669 = vpop.f32.mrb[0].mxu0
      %v670 = vadd.f32 %v513, %v669
      %v671 = vpop.f32.mrb[0].mxu0
      %v672 = vpop.f32.mrb[0].mxu0
      %v673 = vadd.f32 %v513, %v672
      %v674 = vpop.f32.mrb[0].mxu0
      %675 = vmatprep.mubr.bf16.mxu0 %v469
      %676 = vmatmul.mubr.bf16.gmra.mrb[0].mxu0 %v468
      %v677 = vpop.f32.mrb[0].mxu0
      %v678 = vadd.f32 %v513, %v677
      %v679 = vpop.f32.mrb[0].mxu0
      %v680 = vpop.f32.mrb[0].mxu0
      %v681 = vadd.f32 %v513, %v680
      %v682 = vpop.f32.mrb[0].mxu0
      %683 = vmatprep.mubr.bf16.mxu0 %v471
      %684 = vmatmul.mubr.bf16.gmra.mrb[0].mxu0 %v470
      %v685 = vpop.f32.mrb[0].mxu0
      %v686 = vadd.f32 %v513, %v685
      %v687 = vpop.f32.mrb[0].mxu0
      %v688 = vpop.f32.mrb[0].mxu0
      %v689 = vadd.f32 %v513, %v688
      %v690 = vpop.f32.mrb[0].mxu0
      %691 = vmatprep.mubr.bf16.mxu0 %v473
      %692 = vmatmul.mubr.bf16.gmra.mrb[0].mxu0 %v472
      %v693 = vpop.f32.mrb[0].mxu0
      %v694 = vadd.f32 %v513, %v693
      %v695 = vpop.f32.mrb[0].mxu0
      %v696 = vpop.f32.mrb[0].mxu0
      %v697 = vadd.f32 %v513, %v696
      %v698 = vpop.f32.mrb[0].mxu0
      %699 = vmatprep.mubr.bf16.mxu0 %v475
      %700 = vmatmul.mubr.bf16.gmra.mrb[0].mxu0 %v474
      %v701 = vpop.f32.mrb[0].mxu0
      %v702 = vadd.f32 %v513, %v701
      %v703 = vpop.f32.mrb[0].mxu0
      %v704 = vpop.f32.mrb[0].mxu0
      %v705 = vadd.f32 %v513, %v704
      %v706 = vpop.f32.mrb[0].mxu0
      %707 = vdwg.mxu0
      %vm708 = vcmask 80896
      %709 = vst.msk [vmem:[%s226] sm:$0xff] %vm708, %v646
      %710 = vst.msk [vmem:[%s226 + $0x8] sm:$0xff] %vm708, %v649
      %711 = vst.msk [vmem:[%s226 + $0x10] sm:$0xff] %vm708, %v654
      %712 = vst.msk [vmem:[%s226 + $0x18] sm:$0xff] %vm708, %v657
      %713 = vst.msk [vmem:[%s226 + $0x20] sm:$0xff] %vm708, %v662
      %714 = vst.msk [vmem:[%s226 + $0x28] sm:$0xff] %vm708, %v665
      %715 = vst.msk [vmem:[%s226 + $0x30] sm:$0xff] %vm708, %v670
      %716 = vst.msk [vmem:[%s226 + $0x38] sm:$0xff] %vm708, %v673
      %717 = vst.msk [vmem:[%s226 + $0x40] sm:$0xff] %vm708, %v678
      %718 = vst.msk [vmem:[%s226 + $0x48] sm:$0xff] %vm708, %v681
      %719 = vst.msk [vmem:[%s226 + $0x50] sm:$0xff] %vm708, %v686
      %720 = vst.msk [vmem:[%s226 + $0x58] sm:$0xff] %vm708, %v689
      %721 = vst.msk [vmem:[%s226 + $0x60] sm:$0xff] %vm708, %v694
      %722 = vst.msk [vmem:[%s226 + $0x68] sm:$0xff] %vm708, %v697
      %723 = vst.msk [vmem:[%s226 + $0x70] sm:$0xff] %vm708, %v702
      %724 = vst.msk [vmem:[%s226 + $0x78] sm:$0xff] %vm708, %v705
      %s725 = smul.u32 16, %s16
      %p726 = scmp.lt.s32.totalorder %s725, 31
      %s727 = scalar_select %p726, %s725, 31
      %s728 = smul.addr %s727, 8
      %s729 = scalar_lea.vmem %s5, %s728
      // Predicated region
      $region41: #{tpu_custom_call.1} parent=39 // pred_check
        %p730 = pneg %p144
      $region42: #{tpu_custom_call.1} parent=39 // pred_check_branch
        %732 = sbr.rel (%p730) target = $region44
      $region43: #{tpu_custom_call.1} parent=39 // pred_region
        %s733 = smul.u32 16, %s16
      $region44: #{tpu_custom_call.1} parent=39 // pred_fallthru
        _
    $region40: #{tpu_custom_call.1} parent=5 // pred_fallthru
      _
    %p734 = scmp.le.s32.totalorder 2, %s11
    // Predicated region
    $region45: #{tpu_custom_call.1} parent=5 // pred_check
      %p735 = pneg %p734
    $region46: #{tpu_custom_call.1} parent=5 // pred_check_branch
      %737 = sbr.rel (%p735) target = $region48
    $region47: #{tpu_custom_call.1} parent=5 // pred_region
      %s738 = ssub.s32 %s11, 2
      // Predicated region
      $region49: #{tpu_custom_call.1} parent=47 // pred_check
        %p739 = pneg %p150
      $region50: #{tpu_custom_call.1} parent=47 // pred_check_branch
        %741 = sbr.rel (%p739) target = $region52
      $region51: #{tpu_custom_call.1} parent=47 // pred_region
        %s742 = smul.u32 16, %s17
        %p743 = scmp.lt.s32.totalorder %s742, 31
        %s744 = scalar_select %p743, %s742, 31
        %s745 = smul.addr %s744, 8
        %s746 = scalar_lea.vmem %s5, %s745
      $region52: #{tpu_custom_call.1} parent=47 // pred_fallthru
        _
    $region48: #{tpu_custom_call.1} parent=5 // pred_fallthru
      _
  $region6: #{tpu_custom_call.1} parent=0 // loop_footer
    %s15 = sadd.s32 1, %s11
  $region7: #{tpu_custom_call.1} parent=0 // loop_footer_branch
    %10 = sbr.rel target = $region3
  $region8: #{tpu_custom_call.1} parent=0 // loop_exit
    _

</llo_original>
